<compile_context>
chip_gen: v7x
topology: tpu7x:2x2x1
jax: 0.10.0
libtpu: 0.0.40
codegen_flags: <defaults>
</compile_context>

<pallas_src>
import math
from typing import NamedTuple

import jax
import jax.numpy as jnp
from jax.experimental import pallas as pl
from jax.experimental.pallas import tpu as pltpu


class QTensor(NamedTuple):
    r: jax.Array
    i: jax.Array
    j: jax.Array
    k: jax.Array


def _round_up(x: int, m: int) -> int:
    return ((x + m - 1) // m) * m


# ---------------------------------------------------------------------------
# Pallas kernels
# ---------------------------------------------------------------------------

def _linear_kernel(x_ref, w_ref, b_ref, o_ref):
    # x_ref: (TB, TK) f32, w_ref: (TK, TO), b_ref: (1, TO), o_ref: (TB, TO) f32.
    # o_ref's BlockSpec is invariant along the K grid axis -> it is the
    # VMEM-resident accumulator; bias is folded in at k == 0.
    @pl.when(pl.program_id(2) == 0)
    def _():
        o_ref[...] = jnp.broadcast_to(b_ref[...], o_ref.shape).astype(o_ref.dtype)

    o_ref[...] += jnp.dot(
        x_ref[...].astype(w_ref.dtype), w_ref[...],
        preferred_element_type=jnp.float32).astype(o_ref.dtype)


def _make_embed_sum_kernel(tb: int, n_feat: int):
    """Batch-tiled gather-sum over a VMEM-resident embedding table."""

    def kernel(idx_ref, tbl_ref, o_ref):
        # idx_ref: SMEM (B_pad * n_feat,) int32 flattened gather indices.
        # tbl_ref: VMEM (V, 1, D_pad) concatenated table (resident, copied once).
        # o_ref  : VMEM (tb, D_pad) output tile for batch tile program_id(0).
        base = pl.program_id(0) * (tb * n_feat)
        rows = []
        for b in range(tb):                               # static unroll
            row = tbl_ref[idx_ref[base + b * n_feat]]      # (1, D_pad)
            for f in range(1, n_feat):
                row = row + tbl_ref[idx_ref[base + b * n_feat + f]]
            rows.append(row)
        # Single unmasked, lane-dense (tb, D_pad) store per grid step.
        o_ref[...] = jnp.concatenate(rows, axis=0)

    return kernel


# ---------------------------------------------------------------------------
# Parameter construction (padding / transpose done ONCE here, not per call)
# ---------------------------------------------------------------------------

def init_linear_params(key, in_features, out_features, *, k_tile=512,
                       out_tile=512, weight_dtype=jnp.float32):
    kw, kb = jax.random.split(key)
    bound = 1.0 / math.sqrt(in_features)            # PyTorch Linear default init
    weight = jax.random.uniform(kw, (out_features, in_features),
                                jnp.float32, -bound, bound)
    bias = jax.random.uniform(kb, (out_features,), jnp.float32, -bound, bound)

    # K always padded to a multiple of 128 (unmasked vld / full MXU feed).
    in_pad = _round_up(in_features, 128)
    tk = min(k_tile, in_pad)
    while in_pad % tk:                              # 128-multiple divisor of in_pad
        tk -= 128
    out_pad = _round_up(out_features, 128)          # lane-dense output columns
    to = min(out_tile, out_pad)
    while out_pad % to:
        to -= 128

    # One-time transpose to the MXU-native (K, N) layout.
    w_pad = jnp.pad(weight.T, ((0, in_pad - in_features),
                               (0, out_pad - out_features))).astype(weight_dtype)
    b_pad = jnp.pad(bias, (0, out_pad - out_features)).reshape(1, out_pad)
    return {"kind": "linear", "weight": weight, "bias": bias,
            "w_pad": w_pad, "b_pad": b_pad,
            "in_features": in_features, "out_features": out_features,
            "in_pad": in_pad, "out_pad": out_pad, "tk": tk, "to": to}


def init_integer_params(key, input_dims, out_dim):
    keys = jax.random.split(key, len(input_dims))
    tables = []
    for k, n in zip(keys, input_dims):
        # xavier_uniform with gain sqrt(2) on (n, out_dim)
        a = math.sqrt(2.0) * math.sqrt(6.0 / (n + out_dim))
        tables.append(jax.random.uniform(k, (n, out_dim), jnp.float32, -a, a))

    d_pad = _round_up(out_dim, 128)                 # lane-dense embedding rows
    big = jnp.concatenate(tables, axis=0)           # (V, D)
    big = jnp.pad(big, ((0, 0), (0, d_pad - out_dim)))
    V = big.shape[0]
    offs, acc = [], 0
    for n in input_dims:
        offs.append(acc)
        acc += n
    # (V, 1, D_pad): dynamic indexing on the leading (untiled) dim is cheap.
    # TODO(synk): this layout pads each row to 8 sublanes in VMEM (8x table
    # bytes); for very large vocabularies fall back to an HBM DMA-gather path.
    return {"kind": "integer", "tables": tables, "input_dims": list(input_dims),
            "table": big.reshape(V, 1, d_pad),
            "offsets": jnp.asarray(offs, dtype=jnp.int32),
            "dims_arr": jnp.asarray(list(input_dims), dtype=jnp.int32),
            "out_dim": out_dim, "d_pad": d_pad}


# ---------------------------------------------------------------------------
# Wrappers
# ---------------------------------------------------------------------------

def linear_encode(x, p):
    B, In = x.shape
    assert In == p["in_features"]
    Out, out_pad = p["out_features"], p["out_pad"]
    in_pad, tk, to = p["in_pad"], p["tk"], p["to"]

    tb = min(256, _round_up(B, 8))
    b_pad = _round_up(B, tb)
    xp = x
    if b_pad != B or in_pad != In:
        xp = jnp.pad(x, ((0, b_pad - B), (0, in_pad - In)))

    grid = (b_pad // tb, out_pad // to, in_pad // tk)
    out = pl.pallas_call(
        _linear_kernel,
        out_shape=jax.ShapeDtypeStruct((b_pad, out_pad), jnp.float32),
        grid_spec=pltpu.PrefetchScalarGridSpec(
            num_scalar_prefetch=0,
            grid=grid,
            in_specs=[
                pl.BlockSpec((tb, tk), lambda i, j, k: (i, k)),   # x tile
                pl.BlockSpec((tk, to), lambda i, j, k: (k, j)),   # weight (K,N) tile
                pl.BlockSpec((1, to), lambda i, j, k: (0, j)),    # bias tile
            ],
            out_specs=pl.BlockSpec((tb, to), lambda i, j, k: (i, j))),
        compiler_params=pltpu.CompilerParams(
            dimension_semantics=("parallel", "parallel", "arbitrary"),
            vmem_limit_bytes=32 * 1024 * 1024),
        cost_estimate=pl.CostEstimate(
            flops=2 * b_pad * in_pad * out_pad,
            transcendentals=0,
            bytes_accessed=4 * (b_pad * in_pad + out_pad * in_pad
                                + out_pad + b_pad * out_pad)),
    )(xp, p["w_pad"], p["b_pad"])
    return out[:B, :Out]


def integer_encode_sum(x_int, p):
    B, F = x_int.shape
    d_pad, D = p["d_pad"], p["out_dim"]
    table = p["table"]                                      # (V, 1, D_pad)
    V = table.shape[0]
    assert F <= len(p["input_dims"]), "more feature columns than embedding tables"

    # Offset each feature column into the concatenated table.  Column order
    # must match input_dims (same as the PyTorch loop over x.size(1)).
    # TODO(synk): PyTorch Embedding raises on out-of-range ids; we clamp instead.
    xi = jnp.clip(x_int.astype(jnp.int32), 0, p["dims_arr"][:F][None, :] - 1)
    idx = xi + p["offsets"][:F][None, :]

    tb = min(64, _round_up(B, 8))
    b_pad = _round_up(B, tb)
    if b_pad != B:
        idx = jnp.pad(idx, ((0, b_pad - B), (0, 0)))        # pad with valid index 0
    idx_flat = idx.reshape(-1)                              # 1D -> cheap SMEM layout

    out = pl.pallas_call(
        _make_embed_sum_kernel(tb, F),
        out_shape=jax.ShapeDtypeStruct((b_pad, d_pad), jnp.float32),
        grid_spec=pltpu.PrefetchScalarGridSpec(
            num_scalar_prefetch=1,                          # idx -> SMEM
            grid=(b_pad // tb,),
            in_specs=[pl.BlockSpec((V, 1, d_pad),
                                   lambda i, idx_ref: (0, 0, 0))],  # whole table, resident
            out_specs=pl.BlockSpec((tb, d_pad), lambda i, idx_ref: (i, 0))),
        compiler_params=pltpu.CompilerParams(
            dimension_semantics=("parallel",),
            vmem_limit_bytes=32 * 1024 * 1024),
        cost_estimate=pl.CostEstimate(
            flops=b_pad * F * d_pad,
            transcendentals=0,
            bytes_accessed=4 * (V * d_pad + b_pad * d_pad + b_pad * F)),
    )(idx_flat, table)
    return out[:B, :D]


def naive_quaternion_encoder(x, params):
    """Forward pass of NaiveQuaternionEncoder.

    params["kind"] == "linear":  Linear encoder (weight (Out,In), bias (Out,))
    params["kind"] == "integer": IntegerEncoder with combine='sum'
    Returns QTensor(encoded, encoded, encoded, encoded).
    """
    if params["kind"] == "linear":
        encoded = linear_encode(x, params)
    else:
        xi = x if x.ndim > 1 else x[:, None]
        encoded = integer_encode_sum(xi, params)
    # .clone() x4: JAX arrays are immutable -> sharing one array is equivalent.
    return QTensor(encoded, encoded, encoded, encoded)


# ---------------------------------------------------------------------------
if __name__ == "__main__":
    key = jax.random.PRNGKey(0)
    k_lin, k_int, k_x, k_xi = jax.random.split(key, 4)

    # --- Linear path: input_dims = 16 (int), out_dim = 32, batch = 8 ---
    B, In, Out = 8, 16, 32
    lin_params = init_linear_params(k_lin, In, Out)
    x_lin = jax.random.normal(k_x, (B, In), jnp.float32)
    q_lin = naive_quaternion_encoder(x_lin, lin_params)
    jax.block_until_ready(q_lin.r)

    ref_lin = jnp.dot(x_lin, lin_params["weight"].T,
                      precision=jax.lax.Precision.HIGHEST) + lin_params["bias"]
    assert jnp.allclose(q_lin.r, ref_lin, atol=1e-4, rtol=1e-4)
    assert jnp.allclose(q_lin.k, ref_lin, atol=1e-4, rtol=1e-4)

    # --- IntegerEncoder path: input_dims = [5, 7, 3], combine='sum' ---
    input_dims = [5, 7, 3]
    int_params = init_integer_params(k_int, input_dims, Out)
    x_int = jnp.stack(
        [jax.random.randint(jax.random.fold_in(k_xi, f), (B,), 0, n)
         for f, n in enumerate(input_dims)], axis=1).astype(jnp.int32)
    q_int = naive_quaternion_encoder(x_int, int_params)
    jax.block_until_ready(q_int.r)

    ref_int = sum(int_params["tables"][f][x_int[:, f]] for f in range(len(input_dims)))
    assert jnp.allclose(q_int.r, ref_int, atol=1e-5)
    assert jnp.allclose(q_int.j, ref_int, atol=1e-5)

    print("KERNEL_OK")
</pallas_src>

<mosaic_0001>
module attributes {stable_mosaic.version = 11 : i64} {
  func.func @_linear_kernel(%arg0: i32, %arg1: i32, %arg2: i32, %arg3: memref<8x128xf32, #tpu.memory_space<vmem>>, %arg4: memref<128x128xf32, #tpu.memory_space<vmem>>, %arg5: memref<1x128xf32, #tpu.memory_space<vmem>>, %arg6: memref<8x128xf32, #tpu.memory_space<vmem>>) attributes {dimension_semantics = [#tpu.dimension_semantics<parallel>, #tpu.dimension_semantics<parallel>, #tpu.dimension_semantics<arbitrary>], iteration_bounds = array<i64: 1, 1, 1>, scalar_prefetch = 0 : i64, scratch_operands = 0 : i64, tpu.core_type = #tpu.core_type<tc>, window_params = [{transform_indices = @transform_0, window_bounds = array<i64: 8, 128>}, {transform_indices = @transform_1, window_bounds = array<i64: 128, 128>}, {transform_indices = @transform_2, window_bounds = array<i64: 1, 128>}, {transform_indices = @transform_3, window_bounds = array<i64: 8, 128>}]} {
    %c0_i32 = arith.constant 0 : i32
    %0 = arith.cmpi eq, %arg2, %c0_i32 : i32
    %1 = arith.extui %0 : i1 to i32
    %c0_i32_0 = arith.constant 0 : i32
    %2 = arith.cmpi ne, %1, %c0_i32_0 : i32
    scf.if %2 {
      %c0_8 = arith.constant 0 : index
      %c0_9 = arith.constant 0 : index
      %9 = vector.load %arg5[%c0_8, %c0_9] : memref<1x128xf32, #tpu.memory_space<vmem>>, vector<1x128xf32>
      %10 = vector.shape_cast %9 : vector<1x128xf32> to vector<1x128xf32>
      %11 = vector.broadcast %10 : vector<1x128xf32> to vector<8x128xf32>
      %c0_10 = arith.constant 0 : index
      %c0_11 = arith.constant 0 : index
      %12 = vector.load %arg6[%c0_10, %c0_11] : memref<8x128xf32, #tpu.memory_space<vmem>>, vector<8x128xf32>
      tpu.vector_store %arg6[%c0_10, %c0_11], %11 {strides = array<i32>} : memref<8x128xf32, #tpu.memory_space<vmem>>, vector<8x128xf32>,
    } else {
    }
    %c0 = arith.constant 0 : index
    %c0_1 = arith.constant 0 : index
    %3 = vector.load %arg6[%c0, %c0_1] : memref<8x128xf32, #tpu.memory_space<vmem>>, vector<8x128xf32>
    %c0_2 = arith.constant 0 : index
    %c0_3 = arith.constant 0 : index
    %4 = vector.load %arg3[%c0_2, %c0_3] : memref<8x128xf32, #tpu.memory_space<vmem>>, vector<8x128xf32>
    %c0_4 = arith.constant 0 : index
    %c0_5 = arith.constant 0 : index
    %5 = vector.load %arg4[%c0_4, %c0_5] : memref<128x128xf32, #tpu.memory_space<vmem>>, vector<128x128xf32>
    %cst = arith.constant dense<0.000000e+00> : vector<8x128xf32>
    %6 = tpu.matmul %4, %5, %cst {dimension_numbers = #tpu.dot_dimension_numbers<[1], [0], [0], [1], [0, 0, 1, 1], [], []>} : vector<8x128xf32>, vector<128x128xf32>, vector<8x128xf32> -> vector<8x128xf32>
    %7 = arith.addf %3, %6 : vector<8x128xf32>
    %c0_6 = arith.constant 0 : index
    %c0_7 = arith.constant 0 : index
    %8 = vector.load %arg6[%c0_6, %c0_7] : memref<8x128xf32, #tpu.memory_space<vmem>>, vector<8x128xf32>
    tpu.vector_store %arg6[%c0_6, %c0_7], %7 {strides = array<i32>} : memref<8x128xf32, #tpu.memory_space<vmem>>, vector<8x128xf32>,
    return
  }
  func.func @transform_0(%arg0: i32, %arg1: i32, %arg2: i32) -> (i32, i32) {
    %c0_i32 = arith.constant 0 : i32
    return %arg0, %arg2 : i32, i32
  }
  func.func @transform_1(%arg0: i32, %arg1: i32, %arg2: i32) -> (i32, i32) {
    %c0_i32 = arith.constant 0 : i32
    return %arg2, %arg1 : i32, i32
  }
  func.func @transform_2(%arg0: i32, %arg1: i32, %arg2: i32) -> (i32, i32) {
    %c0_i32 = arith.constant 0 : i32
    %c0_i32_0 = arith.constant 0 : i32
    return %c0_i32, %arg1 : i32, i32
  }
  func.func @transform_3(%arg0: i32, %arg1: i32, %arg2: i32) -> (i32, i32) {
    %c0_i32 = arith.constant 0 : i32
    return %arg0, %arg1 : i32, i32
  }
}

</mosaic_0001>

<llo_original>
// kernel: tpu_custom_call.1
$region0: #{tpu_custom_call.1}
  #allocation0 [shape = 'u32[]', space=smem, size = 0x4, offset = 0x4, fixed_abs, tag = 'smem constant byte address 0x4 - core index']
  #allocation1 [shape = 'u32[144,128]{1,0:T(1,128)}', space=vmem, size = 0x12000, scoped, tag = 'internal scratch']
  %s0 = inlined_call_operand.hbm [shape: f32[8,128], index: 0, kind: input, shape index: {}]
  %s1 = inlined_call_operand.hbm [shape: f32[128,128], index: 1, kind: input, shape index: {}]
  %s2 = inlined_call_operand.vmem [shape: f32[1,128], index: 2, kind: input, shape index: {}]
  %s3 = inlined_call_operand.hbm [shape: f32[8,128], index: 3, kind: output, shape index: {}]
  %s4 = sld [smem:[#allocation0]]
  $region34: #{tpu_custom_call.1} parent=0
    _
  %s6 = ssub.s32 1, %s4
  %s7 = scalar_select 0, %s6, %s4
  $region1: #{tpu_custom_call.1} parent=0
    #allocation2 [shape = 'u8[4096]{0}', space=vmem, size = 0x1000, scoped, tag = 'input window, operand 0, single buffered']
    #allocation3 [shape = 's32[1]{0}', space=sflag, size = 0x4, scoped, tag = 'scoped memory for tpu_custom_call.1']
    #allocation4 [shape = 's32[1]{0}', space=sflag, size = 0x4, scoped, tag = 'scoped memory for tpu_custom_call.1']
    #allocation5 [shape = 'u8[65536]{0}', space=vmem, size = 0x10000, scoped, tag = 'input window, operand 1, single buffered']
    #allocation6 [shape = 's32[1]{0}', space=sflag, size = 0x4, scoped, tag = 'scoped memory for tpu_custom_call.1']
    #allocation7 [shape = 'u8[4096]{0}', space=vmem, size = 0x1000, scoped, tag = 'output window, operand 0, single buffered']
    %8 = vsyncpa [#allocation3], 0
    %9 = vsyncpa [#allocation6], 0
    %10 = vsyncpa [#allocation4], 0
    // Predicated region
    $region2: #{tpu_custom_call.1} parent=1 // pred_check
      _
    $region3: #{tpu_custom_call.1} parent=1 // pred_check_branch
      %12 = sbr.rel (0) target = $region5
    $region4: #{tpu_custom_call.1} parent=1 // pred_region
      %s14 = ssub.s32 128, 128
      %15 = vsyncadd [#allocation3], %s14
      %s17 = sshll.u32 [#allocation2], 4
      %s18 = int_to_ptr.vmem [resolvable:$true] %s17
      %20 = dma.hbm_to_vmem [thread:$0]  %s0, 128, %s18, [#allocation3]
    $region5: #{tpu_custom_call.1} parent=1 // pred_fallthru
      _
    // Predicated region
    $region6: #{tpu_custom_call.1} parent=1 // pred_check
      _
    $region7: #{tpu_custom_call.1} parent=1 // pred_check_branch
      %22 = sbr.rel (0) target = $region9
    $region8: #{tpu_custom_call.1} parent=1 // pred_region
      %s24 = ssub.s32 2048, 2048
      %25 = vsyncadd [#allocation6], %s24
      %s26 = sshll.u32 [#allocation5], 4
      %s27 = int_to_ptr.vmem [resolvable:$true] %s26
      %32 = dma.hbm_to_vmem [thread:$0]  %s1, 2048, %s27, [#allocation6], 128, 128, 8
    $region9: #{tpu_custom_call.1} parent=1 // pred_fallthru
      _
    // Predicated region
    $region10: #{tpu_custom_call.1} parent=1 // pred_check
      _
    $region11: #{tpu_custom_call.1} parent=1 // pred_check_branch
      %34 = sbr.rel (0) target = $region13
    $region12: #{tpu_custom_call.1} parent=1 // pred_region
      _
    $region13: #{tpu_custom_call.1} parent=1 // pred_fallthru
      _
    // Predicated region
    $region14: #{tpu_custom_call.1} parent=1 // pred_check
      _
    $region15: #{tpu_custom_call.1} parent=1 // pred_check_branch
      %36 = sbr.rel (0) target = $region17
    $region16: #{tpu_custom_call.1} parent=1 // pred_region
      %37 = dma.done [#allocation3], 128
    $region17: #{tpu_custom_call.1} parent=1 // pred_fallthru
      _
    // Predicated region
    $region18: #{tpu_custom_call.1} parent=1 // pred_check
      _
    $region19: #{tpu_custom_call.1} parent=1 // pred_check_branch
      %39 = sbr.rel (0) target = $region21
    $region20: #{tpu_custom_call.1} parent=1 // pred_region
      %40 = dma.done [#allocation6], 2048
    $region21: #{tpu_custom_call.1} parent=1 // pred_fallthru
      _
    %p41 = scmp.eq.s32.totalorder 0, 0
    // Predicated region
    $region22: #{tpu_custom_call.1} parent=1 // pred_check
      %p42 = pneg %p41
    $region23: #{tpu_custom_call.1} parent=1 // pred_check_branch
      %44 = sbr.rel (%p42) target = $region25
    $region24: #{tpu_custom_call.1} parent=1 // pred_region
      %v45 = vld [vmem:[%s2] sm:$0x1]
      %v47 = vlaneseq
      %v48 = vshrl.u32 %v47, 7
      %v49 = vsub.s32 0, %v48
      %v50 = vrot.slane %v45, %v49
      %52 = vst [vmem:[#allocation7] sm:$0xff] %v50
    $region25: #{tpu_custom_call.1} parent=1 // pred_fallthru
      _
    %v53 = vld [vmem:[#allocation7] sm:$0xff]
    %v54 = vld [vmem:[#allocation2] sm:$0xff]
    %v55 = vld [vmem:[#allocation5] sm:$0xff]
    %v56 = vld [vmem:[#allocation5 + $0x8] sm:$0xff]
    %v57 = vld [vmem:[#allocation5 + $0x10] sm:$0xff]
    %v58 = vld [vmem:[#allocation5 + $0x18] sm:$0xff]
    %v59 = vld [vmem:[#allocation5 + $0x20] sm:$0xff]
    %v60 = vld [vmem:[#allocation5 + $0x28] sm:$0xff]
    %v61 = vld [vmem:[#allocation5 + $0x30] sm:$0xff]
    %v62 = vld [vmem:[#allocation5 + $0x38] sm:$0xff]
    %v63 = vld [vmem:[#allocation5 + $0x40] sm:$0xff]
    %v64 = vld [vmem:[#allocation5 + $0x48] sm:$0xff]
    %v65 = vld [vmem:[#allocation5 + $0x50] sm:$0xff]
    %v66 = vld [vmem:[#allocation5 + $0x58] sm:$0xff]
    %v67 = vld [vmem:[#allocation5 + $0x60] sm:$0xff]
    %v68 = vld [vmem:[#allocation5 + $0x68] sm:$0xff]
    %v69 = vld [vmem:[#allocation5 + $0x70] sm:$0xff]
    %v70 = vld [vmem:[#allocation5 + $0x78] sm:$0xff]
    %71 = vmatprep.subr.mxu0 0.0
    %72 = vmatpush1.msra.mxu0 %v55
    %73 = vmatprep.subr.mxu0 0.0
    %74 = vmatpush1.msra.mxu0 %v56
    %75 = vmatprep.subr.mxu0 0.0
    %76 = vmatpush1.msra.mxu0 %v57
    %77 = vmatprep.subr.mxu0 0.0
    %78 = vmatpush1.msra.mxu0 %v58
    %79 = vmatprep.subr.mxu0 0.0
    %80 = vmatpush1.msra.mxu0 %v59
    %81 = vmatprep.subr.mxu0 0.0
    %82 = vmatpush1.msra.mxu0 %v60
    %83 = vmatprep.subr.mxu0 0.0
    %84 = vmatpush1.msra.mxu0 %v61
    %85 = vmatprep.subr.mxu0 0.0
    %86 = vmatpush1.msra.mxu0 %v62
    %87 = vmatprep.subr.mxu0 0.0
    %88 = vmatpush1.msra.mxu0 %v63
    %89 = vmatprep.subr.mxu0 0.0
    %90 = vmatpush1.msra.mxu0 %v64
    %91 = vmatprep.subr.mxu0 0.0
    %92 = vmatpush1.msra.mxu0 %v65
    %93 = vmatprep.subr.mxu0 0.0
    %94 = vmatpush1.msra.mxu0 %v66
    %95 = vmatprep.subr.mxu0 0.0
    %96 = vmatpush1.msra.mxu0 %v67
    %97 = vmatprep.subr.mxu0 0.0
    %98 = vmatpush1.msra.mxu0 %v68
    %99 = vmatprep.subr.mxu0 0.0
    %100 = vmatpush1.msra.mxu0 %v69
    %101 = vmatprep.subr.mxu0 0.0
    %102 = vmatpush1.msra.mxu0 %v70
    %103 = vmatprep.subr.mxu0 0.0
    %104 = vmatpush1.msra.mxu0 0.0
    %105 = vmatprep.subr.mxu0 0.0
    %106 = vmatpush1.msra.mxu0 0.0
    %107 = vmatprep.subr.mxu0 0.0
    %108 = vmatpush1.msra.mxu0 0.0
    %109 = vmatprep.subr.mxu0 0.0
    %110 = vmatpush1.msra.mxu0 0.0
    %111 = vmatprep.subr.mxu0 0.0
    %112 = vmatpush1.msra.mxu0 0.0
    %113 = vmatprep.subr.mxu0 0.0
    %114 = vmatpush1.msra.mxu0 0.0
    %115 = vmatprep.subr.mxu0 0.0
    %116 = vmatpush1.msra.mxu0 0.0
    %117 = vmatprep.subr.mxu0 0.0
    %118 = vmatpush1.msra.mxu0 0.0
    %119 = vmatprep.subr.mxu0 0.0
    %120 = vmatpush1.msra.mxu0 0.0
    %121 = vmatprep.subr.mxu0 0.0
    %122 = vmatpush1.msra.mxu0 0.0
    %123 = vmatprep.subr.mxu0 0.0
    %124 = vmatpush1.msra.mxu0 0.0
    %125 = vmatprep.subr.mxu0 0.0
    %126 = vmatpush1.msra.mxu0 0.0
    %127 = vmatprep.subr.mxu0 0.0
    %128 = vmatpush1.msra.mxu0 0.0
    %129 = vmatprep.subr.mxu0 0.0
    %130 = vmatpush1.msra.mxu0 0.0
    %131 = vmatprep.subr.mxu0 0.0
    %132 = vmatpush1.msra.mxu0 0.0
    %133 = vmatprep.subr.mxu0 0.0
    %134 = vmatpush1.msra.mxu0 0.0
    %135 = vmatprep.mubr.f32.mxu0 0.0
    %136 = vmatmul.mubr.f32.gmra.mrb[0].mxu0 %v54
    %v137 = vpop.f32.mrb[0].mxu0
    %v138 = vadd.f32 0.0, %v137
    %v139 = vpop.f32.mrb[0].mxu0
    %140 = vdwg.mxu0
    %v141 = vadd.f32 %v53, %v138
    %142 = vst [vmem:[#allocation7] sm:$0xff] %v141
    // Predicated region
    $region26: #{tpu_custom_call.1} parent=1 // pred_check
      _
    $region27: #{tpu_custom_call.1} parent=1 // pred_check_branch
      %144 = sbr.rel (0) target = $region29
    $region28: #{tpu_custom_call.1} parent=1 // pred_region
      %s146 = ssub.s32 128, 128
      %147 = vsyncadd [#allocation4], %s146
      %s149 = sshll.u32 [#allocation7], 4
      %s150 = int_to_ptr.vmem [resolvable:$true] %s149
      %152 = dma.vmem_to_hbm [thread:$0]  %s150, 128, %s3, [#allocation4]
    $region29: #{tpu_custom_call.1} parent=1 // pred_fallthru
      _
    // Predicated region
    $region30: #{tpu_custom_call.1} parent=1 // pred_check
      _
    $region31: #{tpu_custom_call.1} parent=1 // pred_check_branch
      %154 = sbr.rel (0) target = $region33
    $region32: #{tpu_custom_call.1} parent=1 // pred_region
      %155 = dma.done [#allocation4], 128
    $region33: #{tpu_custom_call.1} parent=1 // pred_fallthru
      _
    %156 = vsyncpa [#allocation3], 1
    %157 = vsyncpa [#allocation6], 1
    %158 = vsyncpa [#allocation4], 1

</llo_original>
